<compile_context>
chip_gen: v7x
topology: tpu7x:2x2x1
jax: 0.10.0
libtpu: 0.0.40
codegen_flags: <defaults>
</compile_context>

<pallas_src>
import jax
import jax.numpy as jnp
from jax.experimental import pallas as pl
from jax.experimental.pallas import tpu as pltpu


def _pointwise_conv3d_kernel(x_ref, w_ref, b_ref, o_ref):
    # x_ref: (Cin, TS)   spatial tile of one batch element (sublane=Cin, lane=TS)
    # w_ref: (Cout, Cin) 1x1x1 conv weights
    # b_ref: (Cout, 1)   bias (broadcast over lanes)
    # o_ref: (Cout, TS)  lane-dense output tile
    y = jnp.dot(w_ref[...], x_ref[...], preferred_element_type=jnp.float32)
    o_ref[...] = (y + b_ref[...]).astype(o_ref.dtype)


def _choose_lane_tile(S, Cin, Cout, itemsize, vmem_budget_bytes=8 << 20):
    """Largest 128-aligned lane tile whose double-buffered footprint fits budget."""
    if S <= 128:
        return S  # full extent: allowed even if not a multiple of 128
    # Per lane column (double-buffered input + output tiles, f32 accumulation
    # lives in registers / the same output tile):
    bytes_per_lane = 2 * (Cin + Cout) * itemsize
    max_lanes = max(128, (vmem_budget_bytes // bytes_per_lane) // 128 * 128)
    if S <= max_lanes:
        return S
    return int(max_lanes)


def tail3d_forward(x, weight, bias, *, block_s=None):
    """Tail3D.forward: nn.Conv3d(in_channels, out_channels, kernel_size=1)."""
    N, Cin, D, H, W = x.shape
    Cout = weight.shape[0]
    S = D * H * W

    w2d = weight.reshape(Cout, Cin)        # (Cout, Cin, 1, 1, 1) -> (Cout, Cin)
    b2d = bias.reshape(Cout, 1)

    x3 = x.reshape(N, Cin, S)              # NCDHW -> (N, Cin, S): no transpose
    if block_s is None:
        bs = _choose_lane_tile(S, Cin, Cout, x.dtype.itemsize)
    else:
        bs = S if S <= block_s else block_s
    grid = (N, pl.cdiv(S, bs))

    out = pl.pallas_call(
        _pointwise_conv3d_kernel,
        out_shape=jax.ShapeDtypeStruct((N, Cout, S), x.dtype),
        grid=grid,
        in_specs=[
            pl.BlockSpec((None, Cin, bs), lambda n, j: (n, 0, j)),
            pl.BlockSpec((Cout, Cin), lambda n, j: (0, 0)),
            pl.BlockSpec((Cout, 1), lambda n, j: (0, 0)),
        ],
        out_specs=pl.BlockSpec((None, Cout, bs), lambda n, j: (n, 0, j)),
        compiler_params=pltpu.CompilerParams(
            dimension_semantics=("parallel", "parallel")),
    )(x3, w2d, b2d)
    return out.reshape(N, Cout, D, H, W)


if __name__ == "__main__":
    key = jax.random.PRNGKey(0)
    k_x, k_w, k_b = jax.random.split(key, 3)

    N, in_channels, out_channels = 2, 16, 4
    D = H = W = 8                            # S = 512 -> lane-dense output tiles

    x = jax.random.normal(k_x, (N, in_channels, D, H, W), jnp.float32)
    # PyTorch Conv3d(kernel_size=1) parameter layout: (Cout, Cin, 1, 1, 1), (Cout,)
    weight = jax.random.normal(
        k_w, (out_channels, in_channels, 1, 1, 1), jnp.float32
    ) / jnp.sqrt(in_channels)
    bias = jax.random.normal(k_b, (out_channels,), jnp.float32) * 0.1

    y = tail3d_forward(x, weight, bias)
    jax.block_until_ready(y)

    # Pure-JAX reference for the 1x1x1 conv (correctness gate before perf).
    ref = jnp.einsum(
        "oc,ncdhw->nodhw", weight.reshape(out_channels, in_channels), x
    ) + bias.reshape(1, out_channels, 1, 1, 1)

    assert y.shape == (N, out_channels, D, H, W)
    assert bool(jnp.all(jnp.isfinite(y)))
    assert bool(jnp.allclose(y, ref, atol=1e-5, rtol=1e-5))
    print("KERNEL_OK")
</pallas_src>

<mosaic_0001>
module attributes {stable_mosaic.version = 11 : i64} {
  func.func @_pointwise_conv3d_kernel(%arg0: i32, %arg1: i32, %arg2: memref<1x16x512xf32, #tpu.memory_space<vmem>>, %arg3: memref<4x16xf32, #tpu.memory_space<vmem>>, %arg4: memref<4x1xf32, #tpu.memory_space<vmem>>, %arg5: memref<1x4x512xf32, #tpu.memory_space<vmem>>) attributes {dimension_semantics = [#tpu.dimension_semantics<parallel>, #tpu.dimension_semantics<parallel>], iteration_bounds = array<i64: 2, 1>, scalar_prefetch = 0 : i64, scratch_operands = 0 : i64, tpu.core_type = #tpu.core_type<tc>, window_params = [{transform_indices = @transform_0, window_bounds = array<i64: 1, 16, 512>}, {pipeline_mode = #tpu.pipeline_mode<synchronous>, transform_indices = @transform_1, window_bounds = array<i64: 4, 16>}, {pipeline_mode = #tpu.pipeline_mode<synchronous>, transform_indices = @transform_2, window_bounds = array<i64: 4, 1>}, {transform_indices = @transform_3, window_bounds = array<i64: 1, 4, 512>}]} {
    %c0 = arith.constant 0 : index
    %c0_0 = arith.constant 0 : index
    %0 = vector.load %arg3[%c0, %c0_0] : memref<4x16xf32, #tpu.memory_space<vmem>>, vector<4x16xf32>
    %c0_1 = arith.constant 0 : index
    %c0_2 = arith.constant 0 : index
    %c0_3 = arith.constant 0 : index
    %1 = vector.load %arg2[%c0_1, %c0_2, %c0_3] : memref<1x16x512xf32, #tpu.memory_space<vmem>>, vector<1x16x512xf32>
    %2 = vector.shape_cast %1 : vector<1x16x512xf32> to vector<16x512xf32>
    %cst = arith.constant dense<0.000000e+00> : vector<4x512xf32>
    %3 = tpu.matmul %0, %2, %cst {dimension_numbers = #tpu.dot_dimension_numbers<[1], [0], [0], [1], [0, 0, 1, 1], [], []>} : vector<4x16xf32>, vector<16x512xf32>, vector<4x512xf32> -> vector<4x512xf32>
    %c0_4 = arith.constant 0 : index
    %c0_5 = arith.constant 0 : index
    %4 = vector.load %arg4[%c0_4, %c0_5] : memref<4x1xf32, #tpu.memory_space<vmem>>, vector<4x1xf32>
    %5 = vector.broadcast %4 : vector<4x1xf32> to vector<4x512xf32>
    %6 = arith.addf %3, %5 : vector<4x512xf32>
    %c0_6 = arith.constant 0 : index
    %c0_7 = arith.constant 0 : index
    %c0_8 = arith.constant 0 : index
    %7 = vector.load %arg5[%c0_6, %c0_7, %c0_8] : memref<1x4x512xf32, #tpu.memory_space<vmem>>, vector<1x4x512xf32>
    %8 = vector.shape_cast %7 : vector<1x4x512xf32> to vector<4x512xf32>
    %9 = vector.shape_cast %6 : vector<4x512xf32> to vector<1x4x512xf32>
    tpu.vector_store %arg5[%c0_6, %c0_7, %c0_8], %9 {strides = array<i32>} : memref<1x4x512xf32, #tpu.memory_space<vmem>>, vector<1x4x512xf32>,
    return
  }
  func.func @transform_0(%arg0: i32, %arg1: i32) -> (i32, i32, i32) {
    %c0_i32 = arith.constant 0 : i32
    %c0_i32_0 = arith.constant 0 : i32
    return %arg0, %c0_i32, %arg1 : i32, i32, i32
  }
  func.func @transform_1(%arg0: i32, %arg1: i32) -> (i32, i32) {
    %c0_i32 = arith.constant 0 : i32
    %c0_i32_0 = arith.constant 0 : i32
    %c0_i32_1 = arith.constant 0 : i32
    return %c0_i32, %c0_i32_0 : i32, i32
  }
  func.func @transform_2(%arg0: i32, %arg1: i32) -> (i32, i32) {
    %c0_i32 = arith.constant 0 : i32
    %c0_i32_0 = arith.constant 0 : i32
    %c0_i32_1 = arith.constant 0 : i32
    return %c0_i32, %c0_i32_0 : i32, i32
  }
  func.func @transform_3(%arg0: i32, %arg1: i32) -> (i32, i32, i32) {
    %c0_i32 = arith.constant 0 : i32
    %c0_i32_0 = arith.constant 0 : i32
    return %arg0, %c0_i32, %arg1 : i32, i32, i32
  }
}

</mosaic_0001>

<llo_original>
// kernel: tpu_custom_call.1
$region0: #{tpu_custom_call.1}
  #allocation0 [shape = 'u32[]', space=smem, size = 0x4, offset = 0x4, fixed_abs, tag = 'smem constant byte address 0x4 - core index']
  #allocation1 [shape = 'u32[144,128]{1,0:T(1,128)}', space=vmem, size = 0x12000, scoped, tag = 'internal scratch']
  %s0 = inlined_call_operand.hbm [shape: f32[2,16,512], index: 0, kind: input, shape index: {}]
  %s1 = inlined_call_operand.vmem [shape: f32[4,16], index: 1, kind: input, shape index: {}]
  %s2 = inlined_call_operand.vmem [shape: f32[4,1], index: 2, kind: input, shape index: {}]
  %s3 = inlined_call_operand.hbm [shape: f32[2,4,512], index: 3, kind: output, shape index: {}]
  %s4 = sld [smem:[#allocation0]]
  $region49: #{tpu_custom_call.1} parent=0
    _
  %s6 = ssub.s32 1, %s4
  %s7 = scalar_select 0, %s6, %s4
  $region1: #{tpu_custom_call.1} parent=0
    #allocation2 [shape = 'u8[65536]{0}', space=vmem, size = 0x10000, scoped, tag = 'input window, operand 0']
    #allocation3 [shape = 's32[2]{0}', space=sflag, size = 0x8, scoped, tag = 'scoped memory for tpu_custom_call.1']
    #allocation4 [shape = 's32[2]{0}', space=sflag, size = 0x8, scoped, tag = 'scoped memory for tpu_custom_call.1']
    #allocation5 [shape = 'u8[16384]{0}', space=vmem, size = 0x4000, scoped, tag = 'output window, operand 0']
    %8 = vsyncpa [#allocation3], 0
    %s9 = scalar_lea.sflag [#allocation3], 1
    %10 = vsyncpa %s9, 0
    %11 = vsyncpa [#allocation4], 0
    %s12 = scalar_lea.sflag [#allocation4], 1
    %13 = vsyncpa %s12, 0
    loop: start=0, step=1, limit=4
    $region2: #{tpu_custom_call.1} parent=1 // loop_pre_header
      _
    $region3: #{tpu_custom_call.1} parent=1 // loop_header
      %s15 = sphi 0, %s19
      %p16 = scmp.ge.s32.totalorder %s15, 4
      %s22 = sphi 0, %s34
      %s23 = sphi 0, %s30
      %s24 = sphi 0, %s22
      %s25 = sphi 0, %s23
      %s26 = sphi 0, %s24
      %s27 = sphi 0, %s25
      %s39 = sphi 0, %s41
      %s42 = sphi 0, %s39
      %s43 = sphi 0, %s42
      %s59 = sphi 0, %s43
      %s63 = sphi 0, %s63
      %s65 = sphi 0, %s63
      %s66 = sphi 0, %s65
      %s80 = sphi 0, %s66
      %s84 = sphi 0, %s84
      %s86 = sphi 0, %s84
      %s87 = sphi 0, %s86
      %s101 = sphi 0, %s87
      %s109 = sphi 0, %s111
      %s112 = sphi 0, %s109
      %s113 = sphi 0, %s112
      %s129 = sphi 0, %s113
    $region4: #{tpu_custom_call.1} parent=1 // loop_header_branch
      %18 = sbr.rel (%p16) target = $region8
    $region5: #{tpu_custom_call.1} parent=1 // loop_body
      %s20 = ssub.s32 %s15, 1
      %s21 = ssub.s32 %s15, 2
      %s28 = sadd.s32 1, %s23
      %p29 = scmp.ge.s32.totalorder %s28, 1
      %s30 = scalar_select %p29, 0, %s28
      %s31 = sadd.s32 1, %s22
      %s32 = scalar_select %p29, %s31, %s22
      %p33 = scmp.ge.s32.totalorder %s32, 2
      %s34 = scalar_select %p33, 0, %s32
      %s35 = ssub.s32 %s22, %s34
      %s36 = ssub.s32 %s23, %s30
      %s37 = sor.u32 %s35, %s36
      %p38 = scmp.eq.s32.totalorder %s37, 0
      %s40 = sadd.s32 %s39, 1
      %s41 = scalar_select %p38, %s39, %s40
      %p44 = pneg %p38
      %p45 = scmp.eq.s32.totalorder %s15, 1
      %p46 = por %p44, %p45
      %p47 = scmp.ne.s32.totalorder %s39, %s42
      %p48 = scmp.eq.s32.totalorder %s15, 0
      %p49 = por %p47, %p48
      %p50 = scmp.ne.s32.totalorder %s39, %s42
      %p51 = scmp.eq.s32.totalorder %s20, 1
      %p52 = por %p50, %p51
      %p53 = scmp.ne.s32.totalorder %s42, %s43
      %p54 = scmp.eq.s32.totalorder %s20, 0
      %p55 = por %p53, %p54
      %p56 = scmp.ne.s32.totalorder %s42, %s43
      %p57 = scmp.eq.s32.totalorder %s21, 1
      %p58 = por %p56, %p57
      %p60 = scmp.ne.s32.totalorder %s43, %s59
      %p61 = scmp.eq.s32.totalorder %s21, 0
      %p62 = por %p60, %p61
      %s64 = sadd.s32 %s63, 1
      %p67 = scmp.eq.s32.totalorder %s15, 1
      %p68 = scmp.ne.s32.totalorder %s63, %s65
      %p69 = scmp.eq.s32.totalorder %s15, 0
      %p70 = por %p68, %p69
      %p71 = scmp.ne.s32.totalorder %s63, %s65
      %p72 = scmp.eq.s32.totalorder %s20, 1
      %p73 = por %p71, %p72
      %p74 = scmp.ne.s32.totalorder %s65, %s66
      %p75 = scmp.eq.s32.totalorder %s20, 0
      %p76 = por %p74, %p75
      %p77 = scmp.ne.s32.totalorder %s65, %s66
      %p78 = scmp.eq.s32.totalorder %s21, 1
      %p79 = por %p77, %p78
      %p81 = scmp.ne.s32.totalorder %s66, %s80
      %p82 = scmp.eq.s32.totalorder %s21, 0
      %p83 = por %p81, %p82
      %s85 = sadd.s32 %s84, 1
      %p88 = scmp.eq.s32.totalorder %s15, 1
      %p89 = scmp.ne.s32.totalorder %s84, %s86
      %p90 = scmp.eq.s32.totalorder %s15, 0
      %p91 = por %p89, %p90
      %p92 = scmp.ne.s32.totalorder %s84, %s86
      %p93 = scmp.eq.s32.totalorder %s20, 1
      %p94 = por %p92, %p93
      %p95 = scmp.ne.s32.totalorder %s86, %s87
      %p96 = scmp.eq.s32.totalorder %s20, 0
      %p97 = por %p95, %p96
      %p98 = scmp.ne.s32.totalorder %s86, %s87
      %p99 = scmp.eq.s32.totalorder %s21, 1
      %p100 = por %p98, %p99
      %p102 = scmp.ne.s32.totalorder %s87, %s101
      %p103 = scmp.eq.s32.totalorder %s21, 0
      %p104 = por %p102, %p103
      %s105 = ssub.s32 %s22, %s34
      %s106 = ssub.s32 %s23, %s30
      %s107 = sor.u32 %s105, %s106
      %p108 = scmp.eq.s32.totalorder %s107, 0
      %s110 = sadd.s32 %s109, 1
      %s111 = scalar_select %p108, %s109, %s110
      %p114 = pneg %p108
      %p115 = scmp.eq.s32.totalorder %s15, 1
      %p116 = por %p114, %p115
      %p117 = scmp.ne.s32.totalorder %s109, %s112
      %p118 = scmp.eq.s32.totalorder %s15, 0
      %p119 = por %p117, %p118
      %p120 = scmp.ne.s32.totalorder %s109, %s112
      %p121 = scmp.eq.s32.totalorder %s20, 1
      %p122 = por %p120, %p121
      %p123 = scmp.ne.s32.totalorder %s112, %s113
      %p124 = scmp.eq.s32.totalorder %s20, 0
      %p125 = por %p123, %p124
      %p126 = scmp.ne.s32.totalorder %s112, %s113
      %p127 = scmp.eq.s32.totalorder %s21, 1
      %p128 = por %p126, %p127
      %p130 = scmp.ne.s32.totalorder %s113, %s129
      %p131 = scmp.eq.s32.totalorder %s21, 0
      %p132 = por %p130, %p131
      %p133 = scmp.le.s32.totalorder 1, %s15
      %p134 = scmp.lt.s32.totalorder %s15, 3
      %p135 = pnand %p133, %p134
      %p136 = pneg %p135
      // Predicated region
      $region9: #{tpu_custom_call.1} parent=5 // pred_check
        _
      $region10: #{tpu_custom_call.1} parent=5 // pred_check_branch
        %138 = sbr.rel (%p135) target = $region12
      $region11: #{tpu_custom_call.1} parent=5 // pred_region
        %s139 = ssub.s32 %s15, 1
        // Predicated region
        $region13: #{tpu_custom_call.1} parent=11 // pred_check
          %p140 = pneg %p76
        $region14: #{tpu_custom_call.1} parent=11 // pred_check_branch
          %142 = sbr.rel (%p140) target = $region16
        $region15: #{tpu_custom_call.1} parent=11 // pred_region
          _
        $region16: #{tpu_custom_call.1} parent=11 // pred_fallthru
          _
        // Predicated region
        $region17: #{tpu_custom_call.1} parent=11 // pred_check
          %p143 = pneg %p97
        $region18: #{tpu_custom_call.1} parent=11 // pred_check_branch
          %145 = sbr.rel (%p143) target = $region20
        $region19: #{tpu_custom_call.1} parent=11 // pred_region
          _
        $region20: #{tpu_custom_call.1} parent=11 // pred_fallthru
          _
      $region12: #{tpu_custom_call.1} parent=5 // pred_fallthru
        _
      %p146 = scmp.lt.s32.totalorder %s15, 2
      // Predicated region
      $region21: #{tpu_custom_call.1} parent=5 // pred_check
        %p147 = pneg %p146
      $region22: #{tpu_custom_call.1} parent=5 // pred_check_branch
        %149 = sbr.rel (%p147) target = $region24
      $region23: #{tpu_custom_call.1} parent=5 // pred_region
        // Predicated region
        $region25: #{tpu_custom_call.1} parent=23 // pred_check
          %p150 = pneg %p49
        $region26: #{tpu_custom_call.1} parent=23 // pred_check_branch
          %152 = sbr.rel (%p150) target = $region28
        $region27: #{tpu_custom_call.1} parent=23 // pred_region
          %s153 = sand.u32 %s39, 1
          %s154 = scalar_lea.sflag [#allocation3], %s153
          %s155 = sand.u32 %s39, 1
          %s156 = smul.addr %s155, 64
          %s157 = scalar_lea.vmem [#allocation2], %s156
          %s158 = smul.u32 4, %s23
          %s160 = ssub.s32 1024, 1024
          %161 = vsyncadd %s154, %s160
          %s162 = smul.addr %s22, 8
          %s163 = sadd.s32 %s158, %s162
          %s164 = smul.addr %s163, 128
          %s165 = scalar_lea.hbm %s0, %s164
          %s166 = sshll.u32 %s157, 4
          %s167 = int_to_ptr.vmem [resolvable:$true] %s166
          %172 = dma.hbm_to_vmem [thread:$0]  %s165, 1024, %s167, %s154, 512, 512, 32
        $region28: #{tpu_custom_call.1} parent=23 // pred_fallthru
          _
      $region24: #{tpu_custom_call.1} parent=5 // pred_fallthru
        _
      %p173 = scmp.le.s32.totalorder 1, %s15
      %p174 = scmp.lt.s32.totalorder %s15, 3
      %p175 = pnand %p173, %p174
      %p176 = pneg %p175
      // Predicated region
      $region29: #{tpu_custom_call.1} parent=5 // pred_check
        _
      $region30: #{tpu_custom_call.1} parent=5 // pred_check_branch
        %178 = sbr.rel (%p175) target = $region32
      $region31: #{tpu_custom_call.1} parent=5 // pred_region
        %s179 = ssub.s32 %s15, 1
        %s180 = sand.u32 %s42, 1
        %s181 = scalar_lea.sflag [#allocation3], %s180
        %s182 = sand.u32 %s42, 1
        %s183 = smul.addr %s182, 64
        %s184 = scalar_lea.vmem [#allocation2], %s183
        // Predicated region
        $region33: #{tpu_custom_call.1} parent=31 // pred_check
          %p185 = pneg %p55
        $region34: #{tpu_custom_call.1} parent=31 // pred_check_branch
          %187 = sbr.rel (%p185) target = $region36
        $region35: #{tpu_custom_call.1} parent=31 // pred_region
          %188 = dma.done %s181, 1024
        $region36: #{tpu_custom_call.1} parent=31 // pred_fallthru
          _
        %s189 = sand.u32 %s42, 1
        %s190 = scalar_lea.sflag [#allocation3], %s189
        %s191 = sand.u32 %s42, 1
        %s192 = smul.addr %s191, 64
        %s193 = scalar_lea.vmem [#allocation2], %s192
        %p194 = pneg %p55
        %p195 = pneg %p52
        %p196 = pneg %p76
        %p197 = pneg %p73
        %p198 = pneg %p97
        %p199 = pneg %p94
        %p200 = pneg %p125
        %p201 = pneg %p122
        %s202 = sand.u32 %s112, 1
        %s203 = scalar_lea.sflag [#allocation4], %s202
        %s204 = sand.u32 %s112, 1
        %s205 = smul.addr %s204, 16
        %s206 = scalar_lea.vmem [#allocation5], %s205
        %s207 = smul.u32 4, %s25
        %s208 = smul.u32 4, %s25
        %v209 = vld [vmem:[%s1] sm:$0xf]
        %v210 = vld [vmem:[%s184] sm:$0xff]
        %v211 = vld [vmem:[%s184 + $0x8] sm:$0xff]
        %v212 = vld [vmem:[%s184 + $0x10] sm:$0xff]
        %v213 = vld [vmem:[%s184 + $0x18] sm:$0xff]
        %v214 = vld [vmem:[%s184 + $0x20] sm:$0xff]
        %v215 = vld [vmem:[%s184 + $0x28] sm:$0xff]
        %v216 = vld [vmem:[%s184 + $0x30] sm:$0xff]
        %v217 = vld [vmem:[%s184 + $0x38] sm:$0xff]
        %v218 = vld [vmem:[%s2] sm:$0xf]
        %220 = vset.pattern.permute.xlu0 0
        %221 = vperm.xlu0 %220, %v218
        %v222 = vpop.permute.xlu0 %221
        %vm224 = vcmask 130048
        %v226 = vsel %vm224, %v209, 0
        %228 = vmatprep.subr.mxu0 %v211
        %229 = vmatpush1.msra.mxu0 %v210
        %230 = vmatprep.subr.mxu0 %v215
        %231 = vmatpush1.msra.mxu0 %v214
        %232 = vmatprep.subr.mxu0 0.0
        %233 = vmatpush1.msra.mxu0 0.0
        %234 = vmatprep.subr.mxu0 0.0
        %235 = vmatpush1.msra.mxu0 0.0
        %236 = vmatprep.subr.mxu0 0.0
        %237 = vmatpush1.msra.mxu0 0.0
        %238 = vmatprep.subr.mxu0 0.0
        %239 = vmatpush1.msra.mxu0 0.0
        %240 = vmatprep.subr.mxu0 0.0
        %241 = vmatpush1.msra.mxu0 0.0
        %242 = vmatprep.subr.mxu0 0.0
        %243 = vmatpush1.msra.mxu0 0.0
        %244 = vmatprep.subr.mxu0 0.0
        %245 = vmatpush1.msra.mxu0 0.0
        %246 = vmatprep.subr.mxu0 0.0
        %247 = vmatpush1.msra.mxu0 0.0
        %248 = vmatprep.subr.mxu0 0.0
        %249 = vmatpush1.msra.mxu0 0.0
        %250 = vmatprep.subr.mxu0 0.0
        %251 = vmatpush1.msra.mxu0 0.0
        %252 = vmatprep.subr.mxu0 0.0
        %253 = vmatpush1.msra.mxu0 0.0
        %254 = vmatprep.subr.mxu0 0.0
        %255 = vmatpush1.msra.mxu0 0.0
        %256 = vmatprep.subr.mxu0 0.0
        %257 = vmatpush1.msra.mxu0 0.0
        %258 = vmatprep.subr.mxu0 0.0
        %259 = vmatpush1.msra.mxu0 0.0
        %260 = vmatprep.subr.mxu0 0.0
        %261 = vmatpush1.msra.mxu0 0.0
        %262 = vmatprep.subr.mxu0 0.0
        %263 = vmatpush1.msra.mxu0 0.0
        %264 = vmatprep.subr.mxu0 0.0
        %265 = vmatpush1.msra.mxu0 0.0
        %266 = vmatprep.subr.mxu0 0.0
        %267 = vmatpush1.msra.mxu0 0.0
        %268 = vmatprep.subr.mxu0 0.0
        %269 = vmatpush1.msra.mxu0 0.0
        %270 = vmatprep.subr.mxu0 0.0
        %271 = vmatpush1.msra.mxu0 0.0
        %272 = vmatprep.subr.mxu0 0.0
        %273 = vmatpush1.msra.mxu0 0.0
        %274 = vmatprep.subr.mxu0 0.0
        %275 = vmatpush1.msra.mxu0 0.0
        %276 = vmatprep.subr.mxu0 0.0
        %277 = vmatpush1.msra.mxu0 0.0
        %278 = vmatprep.subr.mxu0 0.0
        %279 = vmatpush1.msra.mxu0 0.0
        %280 = vmatprep.subr.mxu0 0.0
        %281 = vmatpush1.msra.mxu0 0.0
        %282 = vmatprep.subr.mxu0 0.0
        %283 = vmatpush1.msra.mxu0 0.0
        %284 = vmatprep.subr.mxu0 0.0
        %285 = vmatpush1.msra.mxu0 0.0
        %286 = vmatprep.subr.mxu0 0.0
        %287 = vmatpush1.msra.mxu0 0.0
        %288 = vmatprep.subr.mxu0 0.0
        %289 = vmatpush1.msra.mxu0 0.0
        %290 = vmatprep.subr.mxu0 0.0
        %291 = vmatpush1.msra.mxu0 0.0
        %292 = vmatprep.mubr.f32.mxu0 0.0
        %293 = vmatmul.mubr.f32.gmra.mrb[0].mxu0 %v226
        %v294 = vpop.f32.mrb[0].mxu0
        %v295 = vadd.f32 %v222, %v294
        %v296 = vpop.f32.mrb[0].mxu0
        %v297 = vadd.f32 %v222, %v296
        %298 = vdwg.mxu0
        %299 = vmatprep.subr.mxu0 %v213
        %300 = vmatpush1.msra.mxu0 %v212
        %301 = vmatprep.subr.mxu0 %v217
        %302 = vmatpush1.msra.mxu0 %v216
        %303 = vmatprep.subr.mxu0 0.0
        %304 = vmatpush1.msra.mxu0 0.0
        %305 = vmatprep.subr.mxu0 0.0
        %306 = vmatpush1.msra.mxu0 0.0
        %307 = vmatprep.subr.mxu0 0.0
        %308 = vmatpush1.msra.mxu0 0.0
        %309 = vmatprep.subr.mxu0 0.0
        %310 = vmatpush1.msra.mxu0 0.0
        %311 = vmatprep.subr.mxu0 0.0
        %312 = vmatpush1.msra.mxu0 0.0
        %313 = vmatprep.subr.mxu0 0.0
        %314 = vmatpush1.msra.mxu0 0.0
        %315 = vmatprep.subr.mxu0 0.0
        %316 = vmatpush1.msra.mxu0 0.0
        %317 = vmatprep.subr.mxu0 0.0
        %318 = vmatpush1.msra.mxu0 0.0
        %319 = vmatprep.subr.mxu0 0.0
        %320 = vmatpush1.msra.mxu0 0.0
        %321 = vmatprep.subr.mxu0 0.0
        %322 = vmatpush1.msra.mxu0 0.0
        %323 = vmatprep.subr.mxu0 0.0
        %324 = vmatpush1.msra.mxu0 0.0
        %325 = vmatprep.subr.mxu0 0.0
        %326 = vmatpush1.msra.mxu0 0.0
        %327 = vmatprep.subr.mxu0 0.0
        %328 = vmatpush1.msra.mxu0 0.0
        %329 = vmatprep.subr.mxu0 0.0
        %330 = vmatpush1.msra.mxu0 0.0
        %331 = vmatprep.subr.mxu0 0.0
        %332 = vmatpush1.msra.mxu0 0.0
        %333 = vmatprep.subr.mxu0 0.0
        %334 = vmatpush1.msra.mxu0 0.0
        %335 = vmatprep.subr.mxu0 0.0
        %336 = vmatpush1.msra.mxu0 0.0
        %337 = vmatprep.subr.mxu0 0.0
        %338 = vmatpush1.msra.mxu0 0.0
        %339 = vmatprep.subr.mxu0 0.0
        %340 = vmatpush1.msra.mxu0 0.0
        %341 = vmatprep.subr.mxu0 0.0
        %342 = vmatpush1.msra.mxu0 0.0
        %343 = vmatprep.subr.mxu0 0.0
        %344 = vmatpush1.msra.mxu0 0.0
        %345 = vmatprep.subr.mxu0 0.0
        %346 = vmatpush1.msra.mxu0 0.0
        %347 = vmatprep.subr.mxu0 0.0
        %348 = vmatpush1.msra.mxu0 0.0
        %349 = vmatprep.subr.mxu0 0.0
        %350 = vmatpush1.msra.mxu0 0.0
        %351 = vmatprep.subr.mxu0 0.0
        %352 = vmatpush1.msra.mxu0 0.0
        %353 = vmatprep.subr.mxu0 0.0
        %354 = vmatpush1.msra.mxu0 0.0
        %355 = vmatprep.subr.mxu0 0.0
        %356 = vmatpush1.msra.mxu0 0.0
        %357 = vmatprep.subr.mxu0 0.0
        %358 = vmatpush1.msra.mxu0 0.0
        %359 = vmatprep.subr.mxu0 0.0
        %360 = vmatpush1.msra.mxu0 0.0
        %361 = vmatprep.subr.mxu0 0.0
        %362 = vmatpush1.msra.mxu0 0.0
        %363 = vmatprep.mubr.f32.mxu0 0.0
        %364 = vmatmul.mubr.f32.gmra.mrb[0].mxu0 %v226
        %v365 = vpop.f32.mrb[0].mxu0
        %v366 = vadd.f32 %v222, %v365
        %v367 = vpop.f32.mrb[0].mxu0
        %v368 = vadd.f32 %v222, %v367
        %369 = vdwg.mxu0
        %v374 = vcombine.low %v295, %v297
        %v375 = vcombine.low %v366, %v368
        %378 = vst [vmem:[%s206] sm:$0xff] %v374
        %379 = vst [vmem:[%s206 + $0x8] sm:$0xff] %v375
        %s380 = sand.u32 %s112, 1
        %s381 = scalar_lea.sflag [#allocation4], %s380
        %s382 = sand.u32 %s112, 1
        %s383 = smul.addr %s382, 16
        %s384 = scalar_lea.vmem [#allocation5], %s383
        // Predicated region
        $region37: #{tpu_custom_call.1} parent=31 // pred_check
          %p385 = pneg %p122
        $region38: #{tpu_custom_call.1} parent=31 // pred_check_branch
          %387 = sbr.rel (%p385) target = $region40
        $region39: #{tpu_custom_call.1} parent=31 // pred_region
          %s388 = smul.u32 4, %s25
          %s390 = ssub.s32 256, 256
          %391 = vsyncadd %s381, %s390
          %s392 = smul.addr %s24, 4
          %s393 = sadd.s32 %s388, %s392
          %s394 = smul.addr %s393, 64
          %s395 = scalar_lea.hbm %s3, %s394
          %s397 = sshll.u32 %s384, 4
          %s398 = int_to_ptr.vmem [resolvable:$true] %s397
          %400 = dma.vmem_to_hbm [thread:$0]  %s398, 256, %s395, %s381
        $region40: #{tpu_custom_call.1} parent=31 // pred_fallthru
          _
      $region32: #{tpu_custom_call.1} parent=5 // pred_fallthru
        _
      %p401 = scmp.le.s32.totalorder 2, %s15
      // Predicated region
      $region41: #{tpu_custom_call.1} parent=5 // pred_check
        %p402 = pneg %p401
      $region42: #{tpu_custom_call.1} parent=5 // pred_check_branch
        %404 = sbr.rel (%p402) target = $region44
      $region43: #{tpu_custom_call.1} parent=5 // pred_region
        %s405 = ssub.s32 %s15, 2
        // Predicated region
        $region45: #{tpu_custom_call.1} parent=43 // pred_check
          %p406 = pneg %p128
        $region46: #{tpu_custom_call.1} parent=43 // pred_check_branch
          %408 = sbr.rel (%p406) target = $region48
        $region47: #{tpu_custom_call.1} parent=43 // pred_region
          %s409 = sand.u32 %s113, 1
          %s410 = scalar_lea.sflag [#allocation4], %s409
          %s411 = sand.u32 %s113, 1
          %s412 = smul.addr %s411, 16
          %s413 = scalar_lea.vmem [#allocation5], %s412
          %414 = dma.done %s410, 256
        $region48: #{tpu_custom_call.1} parent=43 // pred_fallthru
          _
      $region44: #{tpu_custom_call.1} parent=5 // pred_fallthru
        _
    $region6: #{tpu_custom_call.1} parent=1 // loop_footer
      %s19 = sadd.s32 1, %s15
    $region7: #{tpu_custom_call.1} parent=1 // loop_footer_branch
      %14 = sbr.rel target = $region3
    $region8: #{tpu_custom_call.1} parent=1 // loop_exit
      _
    %415 = vsyncpa [#allocation3], 1
    %s416 = scalar_lea.sflag [#allocation3], 1
    %417 = vsyncpa %s416, 1
    %418 = vsyncpa [#allocation4], 1
    %s419 = scalar_lea.sflag [#allocation4], 1
    %420 = vsyncpa %s419, 1

</llo_original>
